<compile_context>
chip_gen: v6e
topology: v6e:2x2x1
jax: 0.10.0
libtpu: 0.0.40
codegen_flags: <defaults>
</compile_context>

<pallas_src>
import math

import jax
import jax.numpy as jnp
from jax.experimental import pallas as pl
from jax.experimental.pallas import tpu as pltpu


def _round_up(x: int, m: int) -> int:
    return (x + m - 1) // m * m


def _normalize_rows_f32(w_raw):
    # F.normalize(weight, dim=1, eps=1e-12):  w / max(||w||, 1e-12)
    #   == w * rsqrt(max(sum(w^2), 1e-24))
    # Rows that are all-zero (or garbage-free padded rows) stay finite:
    # rsqrt(1e-24) * 0 == 0.
    w = w_raw.astype(jnp.float32)
    sumsq = jnp.sum(w * w, axis=-1, keepdims=True)
    return w * jax.lax.rsqrt(jnp.maximum(sumsq, 1e-24))


def _make_kernel(use_scratch, slice_batch, tb, compute_dtype):
    if use_scratch:
        def kernel(x_ref, w_ref, o_ref, wn_ref):
            # Normalize the weight tile once per class tile (first inner step);
            # the normalized tile then serves every batch tile from VMEM.
            @pl.when(pl.program_id(1) == 0)
            def _():
                wn_ref[...] = _normalize_rows_f32(w_ref[...]).astype(wn_ref.dtype)

            if slice_batch:
                # Resident features: pick this batch tile's rows in-VMEM.
                start = pl.multiple_of(pl.program_id(1) * tb, 8)
                x = x_ref[pl.ds(start, tb), :]
            else:
                x = x_ref[...]
            x = x.astype(compute_dtype)

            # cosine tile = x @ wn.T   (contraction on the last dim of both
            # operands -- the standard Q@K^T MXU pattern, no in-loop relayout).
            o_ref[...] = jax.lax.dot_general(
                x, wn_ref[...],
                dimension_numbers=(((1,), (1,)), ((), ())),
                preferred_element_type=jnp.float32,
            ).astype(o_ref.dtype)

        return kernel

    def kernel(x_ref, w_ref, o_ref):
        # Single batch tile: normalize in registers, no VMEM scratch round-trip.
        wn = _normalize_rows_f32(w_ref[...]).astype(compute_dtype)
        x = x_ref[...].astype(compute_dtype)
        o_ref[...] = jax.lax.dot_general(
            x, wn,
            dimension_numbers=(((1,), (1,)), ((), ())),
            preferred_element_type=jnp.float32,
        ).astype(o_ref.dtype)

    return kernel


def arcface_linear(features, weight, *, tb_max: int = 256, tc_max: int = 512,
                   use_bf16: bool = False, out_dtype=jnp.float32):
    """cosine = features @ normalize(weight, dim=1).T   via a Pallas TPU kernel.

    features: (B, E), weight: (C, E). Returns (B, C) in ``out_dtype``.
    ``use_bf16`` casts the MXU inputs to bf16 (f32 accumulation): faster but
    approximate -- gated behind this flag.
    """
    B, E = features.shape
    C, E_w = weight.shape
    assert E == E_w, (E, E_w)

    in_dtype = jnp.result_type(features.dtype, weight.dtype)
    compute_dtype = jnp.bfloat16 if use_bf16 else in_dtype

    f_size = features.dtype.itemsize
    w_size = weight.dtype.itemsize
    c_size = jnp.dtype(compute_dtype).itemsize
    o_size = jnp.dtype(out_dtype).itemsize

    # ---- generation-aware VMEM budget (v5e/v6e: 128 MiB, v7x: 64 MiB) -------
    try:
        vmem_cap = int(getattr(pltpu.get_tpu_info(), "vmem_capacity_bytes",
                               64 << 20))
    except Exception:  # conservative fallback if the query is unavailable
        vmem_cap = 64 << 20
    budget = max(vmem_cap - (24 << 20), 16 << 20)

    # ---- balanced batch tiling: B_pad - B < tb (typically < 8) --------------
    def derive_batch(cap):
        cap = max(8, min(cap, _round_up(B, 8)))
        nb0 = pl.cdiv(B, cap)
        tb_ = min(_round_up(pl.cdiv(B, nb0), 8), _round_up(B, 8))
        nb_ = pl.cdiv(B, tb_)
        return tb_, nb_, nb_ * tb_

    tb, n_b, B_pad = derive_batch(tb_max)

    # ---- class tiling: lane-dense (multiple of 128), never pads the weight --
    tc = min(tc_max, _round_up(C, 128))
    # v7x has 2 TensorCores: keep >= 2 blocks on the "parallel" class axis.
    if pl.cdiv(C, tc) < 2 and _round_up(C, 128) >= 256:
        tc = _round_up(pl.cdiv(C, 2), 128)
    if tc > C:
        tc = C  # block may not exceed the array dim (full-dim block is legal)

    # ---- dtype-aware VMEM estimate ------------------------------------------
    def vmem_bytes(tb_, tc_, nb_, b_pad_, resident_):
        feat = (2 * b_pad_ if resident_ else 2 * tb_) * E * f_size
        wgt = 2 * tc_ * E * w_size
        scr = (tc_ * E * c_size) if nb_ > 1 else 0
        out = 2 * tb_ * tc_ * o_size
        return feat + wgt + scr + out

    # Keep the whole (padded) feature matrix resident in VMEM when it fits:
    # it is then DMA'd from HBM once instead of once per class tile.
    resident = (n_b == 1) or (2 * B_pad * E * f_size <= budget // 2)

    while vmem_bytes(tb, tc, n_b, B_pad, resident) > budget and tc > 128:
        tc = max(128, (tc // 2) // 128 * 128)
    if resident and n_b > 1 and vmem_bytes(tb, tc, n_b, B_pad, resident) > budget:
        resident = False  # fall back to streaming feature tiles
    while vmem_bytes(tb, tc, n_b, B_pad, resident) > budget and tb > 8:
        tb, n_b, B_pad = derive_batch(tb // 2)
        resident = n_b == 1
    # TODO(synk): add a K (embedding) grid axis with an f32 accumulator for very
    # large E instead of shrinking tc/tb (keeps tc=512 on v7x at E>=8K).

    if n_b == 1:
        # Single batch tile: use the exact batch extent (full-dim block), no
        # feature padding and no normalized-weight scratch.
        tb, B_pad = B, B

    n_c = pl.cdiv(C, tc)
    use_scratch = n_b > 1
    slice_batch = resident and n_b > 1

    x_in = features
    if resident and B_pad != B:
        # The only wrapper-side copy left: a tiny batch pad of the small
        # feature matrix (the zero rows only feed masked-out output rows).
        x_in = jnp.pad(features, ((0, B_pad - B), (0, 0)))

    if resident:
        feat_spec = pl.BlockSpec((B_pad, E), lambda j, i: (0, 0))
    else:
        feat_spec = pl.BlockSpec((tb, E), lambda j, i: (i, 0))
    in_specs = [
        feat_spec,
        # Weight: block index constant over the inner axis -> each class tile
        # is fetched from HBM exactly once; no padding, no extra copies.
        pl.BlockSpec((tc, E), lambda j, i: (j, 0)),
    ]
    out_spec = pl.BlockSpec((tb, tc), lambda j, i: (i, j))
    scratch_shapes = [pltpu.VMEM((tc, E), compute_dtype)] if use_scratch else []

    need = vmem_bytes(tb, tc, n_b, B_pad, resident)
    vmem_limit = int(min(max(need + (8 << 20), 32 << 20),
                         max(vmem_cap - (16 << 20), 32 << 20)))

    cost = pl.CostEstimate(
        flops=int(2 * B * C * E),
        transcendentals=0,
        bytes_accessed=int(B * E * f_size + C * E * w_size + B * C * o_size),
    )

    kernel = _make_kernel(use_scratch, slice_batch, tb, compute_dtype)

    return pl.pallas_call(
        kernel,
        out_shape=jax.ShapeDtypeStruct((B, C), out_dtype),
        grid_spec=pltpu.PrefetchScalarGridSpec(
            num_scalar_prefetch=0,
            grid=(n_c, n_b),  # class axis OUTER, batch axis INNER
            in_specs=in_specs,
            out_specs=out_spec,
            scratch_shapes=scratch_shapes,
        ),
        compiler_params=pltpu.CompilerParams(
            # Outer class axis is independent -> "parallel" (megacore on v7x);
            # inner batch axis carries the normalized-weight scratch.
            dimension_semantics=("parallel", "arbitrary"),
            vmem_limit_bytes=vmem_limit,
        ),
        cost_estimate=cost,
    )(x_in, weight)


def arcface_linear_ref(features, weight):
    """Pure-JAX reference mirroring F.linear(features, F.normalize(weight))."""
    norm = jnp.sqrt(jnp.sum(weight * weight, axis=1, keepdims=True))
    w_n = weight / jnp.maximum(norm, 1e-12)
    return features @ w_n.T


if __name__ == "__main__":
    embedding_size = 32
    num_classes = 256
    batch = 16

    key = jax.random.PRNGKey(0)
    k_feat, k_w = jax.random.split(key)

    # Deterministic parameter init matching nn.Parameter.uniform_(-stdv, stdv)
    stdv = 1.0 / math.sqrt(embedding_size)
    weight = jax.random.uniform(
        k_w, (num_classes, embedding_size), minval=-stdv, maxval=stdv,
        dtype=jnp.float32,
    )
    features = jax.random.normal(k_feat, (batch, embedding_size),
                                 dtype=jnp.float32)

    ref = arcface_linear_ref(features, weight)

    # 1) Default path: single batch tile -> no scratch, registers-only normalize.
    cosine = jax.block_until_ready(arcface_linear(features, weight))
    assert cosine.shape == (batch, num_classes)
    assert jnp.allclose(cosine, ref, atol=1e-4, rtol=1e-4), \
        float(jnp.max(jnp.abs(cosine - ref)))

    # 2) Multi-batch-tile path: resident features + VMEM normalized-weight
    #    scratch reused across inner batch steps.
    cosine2 = jax.block_until_ready(arcface_linear(features, weight, tb_max=8))
    assert jnp.allclose(cosine2, ref, atol=1e-4, rtol=1e-4), \
        float(jnp.max(jnp.abs(cosine2 - ref)))

    # 3) Optional bf16 MXU path (f32 accumulation) -- looser tolerance by design.
    cosine3 = jax.block_until_ready(
        arcface_linear(features, weight, use_bf16=True))
    assert jnp.allclose(cosine3, ref, atol=1e-1, rtol=5e-2), \
        float(jnp.max(jnp.abs(cosine3 - ref)))

    print("KERNEL_OK")
</pallas_src>

<mosaic_0001>
module attributes {stable_mosaic.version = 11 : i64} {
  func.func @kernel(%arg0: i32, %arg1: i32, %arg2: memref<16x32xf32, #tpu.memory_space<vmem>>, %arg3: memref<128x32xf32, #tpu.memory_space<vmem>>, %arg4: memref<16x128xf32, #tpu.memory_space<vmem>>) attributes {dimension_semantics = [#tpu.dimension_semantics<parallel>, #tpu.dimension_semantics<arbitrary>], iteration_bounds = array<i64: 2, 1>, scalar_prefetch = 0 : i64, scratch_operands = 0 : i64, tpu.core_type = #tpu.core_type<tc>, window_params = [{pipeline_mode = #tpu.pipeline_mode<synchronous>, transform_indices = @transform_0, window_bounds = array<i64: 16, 32>}, {transform_indices = @transform_1, window_bounds = array<i64: 128, 32>}, {transform_indices = @transform_2, window_bounds = array<i64: 16, 128>}]} {
    %c0 = arith.constant 0 : index
    %c0_0 = arith.constant 0 : index
    %0 = vector.load %arg3[%c0, %c0_0] : memref<128x32xf32, #tpu.memory_space<vmem>>, vector<128x32xf32>
    %1 = arith.mulf %0, %0 : vector<128x32xf32>
    %cst = arith.constant dense<0.000000e+00> : vector<128xf32>
    %2 = vector.multi_reduction <add>, %1, %cst [1] : vector<128x32xf32> to vector<128xf32>
    %3 = vector.shape_cast %2 : vector<128xf32> to vector<128x1xf32>
    %cst_1 = arith.constant 1.000000e-24 : f32
    %4 = vector.broadcast %cst_1 : f32 to vector<128x1xf32>
    %5 = arith.maximumf %3, %4 : vector<128x1xf32>
    %6 = math.rsqrt %5 : vector<128x1xf32>
    %7 = vector.broadcast %6 : vector<128x1xf32> to vector<128x32xf32>
    %8 = arith.mulf %0, %7 : vector<128x32xf32>
    %c0_2 = arith.constant 0 : index
    %c0_3 = arith.constant 0 : index
    %9 = vector.load %arg2[%c0_2, %c0_3] : memref<16x32xf32, #tpu.memory_space<vmem>>, vector<16x32xf32>
    %cst_4 = arith.constant dense<0.000000e+00> : vector<16x128xf32>
    %10 = tpu.matmul %9, %8, %cst_4 {dimension_numbers = #tpu.dot_dimension_numbers<[1], [1], [0], [0], [0, 0, 1, 0], [], []>} : vector<16x32xf32>, vector<128x32xf32>, vector<16x128xf32> -> vector<16x128xf32>
    %c0_5 = arith.constant 0 : index
    %c0_6 = arith.constant 0 : index
    %11 = vector.load %arg4[%c0_5, %c0_6] : memref<16x128xf32, #tpu.memory_space<vmem>>, vector<16x128xf32>
    tpu.vector_store %arg4[%c0_5, %c0_6], %10 {strides = array<i32>} : memref<16x128xf32, #tpu.memory_space<vmem>>, vector<16x128xf32>,
    return
  }
  func.func @transform_0(%arg0: i32, %arg1: i32) -> (i32, i32) {
    %c0_i32 = arith.constant 0 : i32
    %c0_i32_0 = arith.constant 0 : i32
    %c0_i32_1 = arith.constant 0 : i32
    return %c0_i32, %c0_i32_0 : i32, i32
  }
  func.func @transform_1(%arg0: i32, %arg1: i32) -> (i32, i32) {
    %c0_i32 = arith.constant 0 : i32
    %c0_i32_0 = arith.constant 0 : i32
    return %arg0, %c0_i32 : i32, i32
  }
  func.func @transform_2(%arg0: i32, %arg1: i32) -> (i32, i32) {
    %c0_i32 = arith.constant 0 : i32
    return %arg1, %arg0 : i32, i32
  }
}

</mosaic_0001>

<llo_original>
// kernel: tpu_custom_call.1
$region0: #{tpu_custom_call.1}
  #allocation0 [shape = 'u32[]', space=smem, size = 0x4, offset = 0x4, fixed_abs, tag = 'smem constant byte address 0x4 - core index']
  #allocation1 [shape = 'u32[144,128]{1,0:T(1,128)}', space=vmem, size = 0x12000, scoped, tag = 'internal scratch']
  %s0 = inlined_call_operand.vmem [shape: f32[16,32], index: 0, kind: input, shape index: {}]
  %s1 = inlined_call_operand.vmem [shape: f32[256,32], index: 1, kind: input, shape index: {}]
  %s2 = inlined_call_operand.hbm [shape: f32[16,256], index: 2, kind: output, shape index: {}]
  %s3 = sld [smem:[#allocation0]]
  $region41: #{tpu_custom_call.1} parent=0
    _
  %s5 = ssub.s32 1, %s3
  %s6 = scalar_select 0, %s5, %s3
  $region1: #{tpu_custom_call.1} parent=0
    #allocation2 [shape = 'u8[16384]{0}', space=vmem, size = 0x4000, scoped, tag = 'output window, operand 0']
    #allocation3 [shape = 's32[2]{0}', space=sflag, size = 0x8, scoped, tag = 'scoped memory for tpu_custom_call.1']
    %7 = vsyncpa [#allocation3], 0
    %s8 = scalar_lea.sflag [#allocation3], 1
    %9 = vsyncpa %s8, 0
    loop: start=0, step=1, limit=4
    $region2: #{tpu_custom_call.1} parent=1 // loop_pre_header
      _
    $region3: #{tpu_custom_call.1} parent=1 // loop_header
      %s11 = sphi 0, %s15
      %p12 = scmp.ge.s32.totalorder %s11, 4
      %s18 = sphi 0, %s30
      %s19 = sphi 0, %s26
      %s20 = sphi 0, %s18
      %s21 = sphi 0, %s19
      %s22 = sphi 0, %s20
      %s23 = sphi 0, %s21
      %s31 = sphi 0, %s31
      %s33 = sphi 0, %s31
      %s34 = sphi 0, %s33
      %s48 = sphi 0, %s34
      %s54 = sphi 0, %s56
      %s57 = sphi 0, %s54
      %s58 = sphi 0, %s57
      %s74 = sphi 0, %s58
      %s82 = sphi 0, %s84
      %s85 = sphi 0, %s82
      %s86 = sphi 0, %s85
      %s102 = sphi 0, %s86
    $region4: #{tpu_custom_call.1} parent=1 // loop_header_branch
      %14 = sbr.rel (%p12) target = $region8
    $region5: #{tpu_custom_call.1} parent=1 // loop_body
      %s16 = ssub.s32 %s11, 1
      %s17 = ssub.s32 %s11, 2
      %s24 = sadd.s32 1, %s19
      %p25 = scmp.ge.s32.totalorder %s24, 1
      %s26 = scalar_select %p25, 0, %s24
      %s27 = sadd.s32 1, %s18
      %s28 = scalar_select %p25, %s27, %s18
      %p29 = scmp.ge.s32.totalorder %s28, 2
      %s30 = scalar_select %p29, 0, %s28
      %s32 = sadd.s32 %s31, 1
      %p35 = scmp.eq.s32.totalorder %s11, 1
      %p36 = scmp.ne.s32.totalorder %s31, %s33
      %p37 = scmp.eq.s32.totalorder %s11, 0
      %p38 = por %p36, %p37
      %p39 = scmp.ne.s32.totalorder %s31, %s33
      %p40 = scmp.eq.s32.totalorder %s16, 1
      %p41 = por %p39, %p40
      %p42 = scmp.ne.s32.totalorder %s33, %s34
      %p43 = scmp.eq.s32.totalorder %s16, 0
      %p44 = por %p42, %p43
      %p45 = scmp.ne.s32.totalorder %s33, %s34
      %p46 = scmp.eq.s32.totalorder %s17, 1
      %p47 = por %p45, %p46
      %p49 = scmp.ne.s32.totalorder %s34, %s48
      %p50 = scmp.eq.s32.totalorder %s17, 0
      %p51 = por %p49, %p50
      %s52 = ssub.s32 %s18, %s30
      %p53 = scmp.eq.s32.totalorder %s52, 0
      %s55 = sadd.s32 %s54, 1
      %s56 = scalar_select %p53, %s54, %s55
      %p59 = pneg %p53
      %p60 = scmp.eq.s32.totalorder %s11, 1
      %p61 = por %p59, %p60
      %p62 = scmp.ne.s32.totalorder %s54, %s57
      %p63 = scmp.eq.s32.totalorder %s11, 0
      %p64 = por %p62, %p63
      %p65 = scmp.ne.s32.totalorder %s54, %s57
      %p66 = scmp.eq.s32.totalorder %s16, 1
      %p67 = por %p65, %p66
      %p68 = scmp.ne.s32.totalorder %s57, %s58
      %p69 = scmp.eq.s32.totalorder %s16, 0
      %p70 = por %p68, %p69
      %p71 = scmp.ne.s32.totalorder %s57, %s58
      %p72 = scmp.eq.s32.totalorder %s17, 1
      %p73 = por %p71, %p72
      %p75 = scmp.ne.s32.totalorder %s58, %s74
      %p76 = scmp.eq.s32.totalorder %s17, 0
      %p77 = por %p75, %p76
      %s78 = ssub.s32 %s19, %s26
      %s79 = ssub.s32 %s18, %s30
      %s80 = sor.u32 %s78, %s79
      %p81 = scmp.eq.s32.totalorder %s80, 0
      %s83 = sadd.s32 %s82, 1
      %s84 = scalar_select %p81, %s82, %s83
      %p87 = pneg %p81
      %p88 = scmp.eq.s32.totalorder %s11, 1
      %p89 = por %p87, %p88
      %p90 = scmp.ne.s32.totalorder %s82, %s85
      %p91 = scmp.eq.s32.totalorder %s11, 0
      %p92 = por %p90, %p91
      %p93 = scmp.ne.s32.totalorder %s82, %s85
      %p94 = scmp.eq.s32.totalorder %s16, 1
      %p95 = por %p93, %p94
      %p96 = scmp.ne.s32.totalorder %s85, %s86
      %p97 = scmp.eq.s32.totalorder %s16, 0
      %p98 = por %p96, %p97
      %p99 = scmp.ne.s32.totalorder %s85, %s86
      %p100 = scmp.eq.s32.totalorder %s17, 1
      %p101 = por %p99, %p100
      %p103 = scmp.ne.s32.totalorder %s86, %s102
      %p104 = scmp.eq.s32.totalorder %s17, 0
      %p105 = por %p103, %p104
      %p106 = scmp.le.s32.totalorder 1, %s11
      %p107 = scmp.lt.s32.totalorder %s11, 3
      %p108 = pnand %p106, %p107
      %p109 = pneg %p108
      // Predicated region
      $region9: #{tpu_custom_call.1} parent=5 // pred_check
        _
      $region10: #{tpu_custom_call.1} parent=5 // pred_check_branch
        %111 = sbr.rel (%p108) target = $region12
      $region11: #{tpu_custom_call.1} parent=5 // pred_region
        %s112 = ssub.s32 %s11, 1
        // Predicated region
        $region13: #{tpu_custom_call.1} parent=11 // pred_check
          %p113 = pneg %p44
        $region14: #{tpu_custom_call.1} parent=11 // pred_check_branch
          %115 = sbr.rel (%p113) target = $region16
        $region15: #{tpu_custom_call.1} parent=11 // pred_region
          _
        $region16: #{tpu_custom_call.1} parent=11 // pred_fallthru
          _
      $region12: #{tpu_custom_call.1} parent=5 // pred_fallthru
        _
      %p116 = scmp.lt.s32.totalorder %s11, 2
      // Predicated region
      $region17: #{tpu_custom_call.1} parent=5 // pred_check
        %p117 = pneg %p116
      $region18: #{tpu_custom_call.1} parent=5 // pred_check_branch
        %119 = sbr.rel (%p117) target = $region20
      $region19: #{tpu_custom_call.1} parent=5 // pred_region
        // Predicated region
        $region21: #{tpu_custom_call.1} parent=19 // pred_check
          %p120 = pneg %p64
        $region22: #{tpu_custom_call.1} parent=19 // pred_check_branch
          %122 = sbr.rel (%p120) target = $region24
        $region23: #{tpu_custom_call.1} parent=19 // pred_region
          %s123 = smul.u32 16, %s18
          %p124 = scmp.lt.s32.totalorder %s123, 31
          %s125 = scalar_select %p124, %s123, 31
          %s126 = smul.addr %s125, 8
          %s127 = scalar_lea.vmem %s1, %s126
          %s128 = smul.u32 16, %s18
        $region24: #{tpu_custom_call.1} parent=19 // pred_fallthru
          _
      $region20: #{tpu_custom_call.1} parent=5 // pred_fallthru
        _
      %p129 = scmp.le.s32.totalorder 1, %s11
      %p130 = scmp.lt.s32.totalorder %s11, 3
      %p131 = pnand %p129, %p130
      %p132 = pneg %p131
      // Predicated region
      $region25: #{tpu_custom_call.1} parent=5 // pred_check
        _
      $region26: #{tpu_custom_call.1} parent=5 // pred_check_branch
        %134 = sbr.rel (%p131) target = $region28
      $region27: #{tpu_custom_call.1} parent=5 // pred_region
        %s135 = ssub.s32 %s11, 1
        %p136 = pneg %p44
        %p137 = pneg %p41
        %s138 = smul.u32 16, %s20
        %p139 = scmp.lt.s32.totalorder %s138, 31
        %s140 = scalar_select %p139, %s138, 31
        %s141 = smul.addr %s140, 8
        %s142 = scalar_lea.vmem %s1, %s141
        %p143 = pneg %p70
        %p144 = pneg %p67
        %p145 = pneg %p98
        %p146 = pneg %p95
        %s147 = sand.u32 %s85, 1
        %s148 = scalar_lea.sflag [#allocation3], %s147
        %s149 = sand.u32 %s85, 1
        %s150 = smul.addr %s149, 16
        %s151 = scalar_lea.vmem [#allocation2], %s150
        %s152 = smul.u32 16, %s20
        %p153 = scmp.lt.s32.totalorder %s152, 31
        %s154 = scalar_select %p153, %s152, 31
        %s155 = smul.addr %s154, 8
        %s156 = scalar_lea.vmem %s1, %s155
        %s157 = smul.u32 16, %s20
        %s158 = smul.u32 2, %s21
        %v159 = vld [vmem:[%s156] sm:$0xff]
        %v160 = vld [vmem:[%s156 + $0x8] sm:$0xff]
        %v161 = vld [vmem:[%s156 + $0x10] sm:$0xff]
        %v162 = vld [vmem:[%s156 + $0x18] sm:$0xff]
        %v163 = vld [vmem:[%s156 + $0x20] sm:$0xff]
        %v164 = vld [vmem:[%s156 + $0x28] sm:$0xff]
        %v165 = vld [vmem:[%s156 + $0x30] sm:$0xff]
        %v166 = vld [vmem:[%s156 + $0x38] sm:$0xff]
        %v167 = vld [vmem:[%s156 + $0x40] sm:$0xff]
        %v168 = vld [vmem:[%s156 + $0x48] sm:$0xff]
        %v169 = vld [vmem:[%s156 + $0x50] sm:$0xff]
        %v170 = vld [vmem:[%s156 + $0x58] sm:$0xff]
        %v171 = vld [vmem:[%s156 + $0x60] sm:$0xff]
        %v172 = vld [vmem:[%s156 + $0x68] sm:$0xff]
        %v173 = vld [vmem:[%s156 + $0x70] sm:$0xff]
        %v174 = vld [vmem:[%s156 + $0x78] sm:$0xff]
        %v175 = vmul.f32 %v159, %v159
        %v176 = vmul.f32 %v160, %v160
        %v177 = vmul.f32 %v161, %v161
        %v178 = vmul.f32 %v162, %v162
        %v179 = vmul.f32 %v163, %v163
        %v180 = vmul.f32 %v164, %v164
        %v181 = vmul.f32 %v165, %v165
        %v182 = vmul.f32 %v166, %v166
        %v183 = vmul.f32 %v167, %v167
        %v184 = vmul.f32 %v168, %v168
        %v185 = vmul.f32 %v169, %v169
        %v186 = vmul.f32 %v170, %v170
        %v187 = vmul.f32 %v171, %v171
        %v188 = vmul.f32 %v172, %v172
        %v189 = vmul.f32 %v173, %v173
        %v190 = vmul.f32 %v174, %v174
        %vm191 = vcmask 261120
        %v192 = vsel %vm191, %v175, 0.0
        %193 = vadd.xlane.f32.xlu0 %v192
        %v194 = vpop.xlane.xlu0 %193
        %v195 = vsel %vm191, %v176, 0.0
        %196 = vadd.xlane.f32.xlu0 %v195
        %v197 = vpop.xlane.xlu0 %196
        %v198 = vsel %vm191, %v177, 0.0
        %199 = vadd.xlane.f32.xlu0 %v198
        %v200 = vpop.xlane.xlu0 %199
        %v201 = vsel %vm191, %v178, 0.0
        %202 = vadd.xlane.f32.xlu0 %v201
        %v203 = vpop.xlane.xlu0 %202
        %v204 = vsel %vm191, %v179, 0.0
        %205 = vadd.xlane.f32.xlu0 %v204
        %v206 = vpop.xlane.xlu0 %205
        %v207 = vsel %vm191, %v180, 0.0
        %208 = vadd.xlane.f32.xlu0 %v207
        %v209 = vpop.xlane.xlu0 %208
        %v210 = vsel %vm191, %v181, 0.0
        %211 = vadd.xlane.f32.xlu0 %v210
        %v212 = vpop.xlane.xlu0 %211
        %v213 = vsel %vm191, %v182, 0.0
        %214 = vadd.xlane.f32.xlu0 %v213
        %v215 = vpop.xlane.xlu0 %214
        %v216 = vsel %vm191, %v183, 0.0
        %217 = vadd.xlane.f32.xlu0 %v216
        %v218 = vpop.xlane.xlu0 %217
        %v219 = vsel %vm191, %v184, 0.0
        %220 = vadd.xlane.f32.xlu0 %v219
        %v221 = vpop.xlane.xlu0 %220
        %v222 = vsel %vm191, %v185, 0.0
        %223 = vadd.xlane.f32.xlu0 %v222
        %v224 = vpop.xlane.xlu0 %223
        %v225 = vsel %vm191, %v186, 0.0
        %226 = vadd.xlane.f32.xlu0 %v225
        %v227 = vpop.xlane.xlu0 %226
        %v228 = vsel %vm191, %v187, 0.0
        %229 = vadd.xlane.f32.xlu0 %v228
        %v230 = vpop.xlane.xlu0 %229
        %v231 = vsel %vm191, %v188, 0.0
        %232 = vadd.xlane.f32.xlu0 %v231
        %v233 = vpop.xlane.xlu0 %232
        %v234 = vsel %vm191, %v189, 0.0
        %235 = vadd.xlane.f32.xlu0 %v234
        %v236 = vpop.xlane.xlu0 %235
        %v237 = vsel %vm191, %v190, 0.0
        %238 = vadd.xlane.f32.xlu0 %v237
        %v239 = vpop.xlane.xlu0 %238
        %v240 = vmax.f32 %v194, 1e-24
        %v241 = vmax.f32 %v197, 1e-24
        %v242 = vmax.f32 %v200, 1e-24
        %v243 = vmax.f32 %v203, 1e-24
        %v244 = vmax.f32 %v206, 1e-24
        %v245 = vmax.f32 %v209, 1e-24
        %v246 = vmax.f32 %v212, 1e-24
        %v247 = vmax.f32 %v215, 1e-24
        %v248 = vmax.f32 %v218, 1e-24
        %v249 = vmax.f32 %v221, 1e-24
        %v250 = vmax.f32 %v224, 1e-24
        %v251 = vmax.f32 %v227, 1e-24
        %v252 = vmax.f32 %v230, 1e-24
        %v253 = vmax.f32 %v233, 1e-24
        %v254 = vmax.f32 %v236, 1e-24
        %v255 = vmax.f32 %v239, 1e-24
        %v256 = vrsqrt.pop %v240
        %v257 = vrsqrt.pop %v241
        %v258 = vrsqrt.pop %v242
        %v259 = vrsqrt.pop %v243
        %v260 = vrsqrt.pop %v244
        %v261 = vrsqrt.pop %v245
        %v262 = vrsqrt.pop %v246
        %v263 = vrsqrt.pop %v247
        %v264 = vrsqrt.pop %v248
        %v265 = vrsqrt.pop %v249
        %v266 = vrsqrt.pop %v250
        %v267 = vrsqrt.pop %v251
        %v268 = vrsqrt.pop %v252
        %v269 = vrsqrt.pop %v253
        %v270 = vrsqrt.pop %v254
        %v271 = vrsqrt.pop %v255
        %v272 = vmul.f32 %v159, %v256
        %v273 = vmul.f32 %v160, %v257
        %v274 = vmul.f32 %v161, %v258
        %v275 = vmul.f32 %v162, %v259
        %v276 = vmul.f32 %v163, %v260
        %v277 = vmul.f32 %v164, %v261
        %v278 = vmul.f32 %v165, %v262
        %v279 = vmul.f32 %v166, %v263
        %v280 = vmul.f32 %v167, %v264
        %v281 = vmul.f32 %v168, %v265
        %v282 = vmul.f32 %v169, %v266
        %v283 = vmul.f32 %v170, %v267
        %v284 = vmul.f32 %v171, %v268
        %v285 = vmul.f32 %v172, %v269
        %v286 = vmul.f32 %v173, %v270
        %v287 = vmul.f32 %v174, %v271
        %v288 = vld [vmem:[%s0] sm:$0xff]
        %v289 = vld [vmem:[%s0 + $0x8] sm:$0xff]
        %v291 = vsel %vm191, %v288, 0
        %v294 = vsel %vm191, %v289, 0
        %v297 = vsel %vm191, %v272, 0
        %v300 = vsel %vm191, %v273, 0
        %v303 = vsel %vm191, %v274, 0
        %v306 = vsel %vm191, %v275, 0
        %v309 = vsel %vm191, %v276, 0
        %v312 = vsel %vm191, %v277, 0
        %v315 = vsel %vm191, %v278, 0
        %v318 = vsel %vm191, %v279, 0
        %v321 = vsel %vm191, %v280, 0
        %v324 = vsel %vm191, %v281, 0
        %v327 = vsel %vm191, %v282, 0
        %v330 = vsel %vm191, %v283, 0
        %v333 = vsel %vm191, %v284, 0
        %v336 = vsel %vm191, %v285, 0
        %v339 = vsel %vm191, %v286, 0
        %v342 = vsel %vm191, %v287, 0
        %344 = vmatprep.subr.mxu0 0.0
        %345 = vmatpush1.xpose.msra.mxu0 %v342
        %346 = vmatprep.subr.mxu0 0.0
        %347 = vmatpush1.xpose.msra.mxu0 %v339
        %348 = vmatprep.subr.mxu0 0.0
        %349 = vmatpush1.xpose.msra.mxu0 %v336
        %350 = vmatprep.subr.mxu0 0.0
        %351 = vmatpush1.xpose.msra.mxu0 %v333
        %352 = vmatprep.subr.mxu0 0.0
        %353 = vmatpush1.xpose.msra.mxu0 %v330
        %354 = vmatprep.subr.mxu0 0.0
        %355 = vmatpush1.xpose.msra.mxu0 %v327
        %356 = vmatprep.subr.mxu0 0.0
        %357 = vmatpush1.xpose.msra.mxu0 %v324
        %358 = vmatprep.subr.mxu0 0.0
        %359 = vmatpush1.xpose.msra.mxu0 %v321
        %360 = vmatprep.subr.mxu0 0.0
        %361 = vmatpush1.xpose.msra.mxu0 %v318
        %362 = vmatprep.subr.mxu0 0.0
        %363 = vmatpush1.xpose.msra.mxu0 %v315
        %364 = vmatprep.subr.mxu0 0.0
        %365 = vmatpush1.xpose.msra.mxu0 %v312
        %366 = vmatprep.subr.mxu0 0.0
        %367 = vmatpush1.xpose.msra.mxu0 %v309
        %368 = vmatprep.subr.mxu0 0.0
        %369 = vmatpush1.xpose.msra.mxu0 %v306
        %370 = vmatprep.subr.mxu0 0.0
        %371 = vmatpush1.xpose.msra.mxu0 %v303
        %372 = vmatprep.subr.mxu0 0.0
        %373 = vmatpush1.xpose.msra.mxu0 %v300
        %374 = vmatprep.subr.mxu0 0.0
        %375 = vmatpush1.xpose.msra.mxu0 %v297
        %376 = vmatprep.subr.mxu0 0.0
        %377 = vmatpush2.xpose.msra.mxu0 0.0
        %378 = vmatprep.subr.mxu0 0.0
        %379 = vmatpush2.xpose.msra.mxu0 0.0
        %380 = vmatprep.subr.mxu0 0.0
        %381 = vmatpush2.xpose.msra.mxu0 0.0
        %382 = vmatprep.subr.mxu0 0.0
        %383 = vmatpush2.xpose.msra.mxu0 0.0
        %384 = vmatprep.subr.mxu0 0.0
        %385 = vmatpush2.xpose.msra.mxu0 0.0
        %386 = vmatprep.subr.mxu0 0.0
        %387 = vmatpush2.xpose.msra.mxu0 0.0
        %388 = vmatprep.subr.mxu0 0.0
        %389 = vmatpush2.xpose.msra.mxu0 0.0
        %390 = vmatprep.subr.mxu0 0.0
        %391 = vmatpush2.xpose.msra.mxu0 0.0
        %392 = vmatprep.subr.mxu0 0.0
        %393 = vmatpush2.xpose.msra.mxu0 0.0
        %394 = vmatprep.subr.mxu0 0.0
        %395 = vmatpush2.xpose.msra.mxu0 0.0
        %396 = vmatprep.subr.mxu0 0.0
        %397 = vmatpush2.xpose.msra.mxu0 0.0
        %398 = vmatprep.subr.mxu0 0.0
        %399 = vmatpush2.xpose.msra.mxu0 0.0
        %400 = vmatprep.subr.mxu0 0.0
        %401 = vmatpush2.xpose.msra.mxu0 0.0
        %402 = vmatprep.subr.mxu0 0.0
        %403 = vmatpush2.xpose.msra.mxu0 0.0
        %404 = vmatprep.subr.mxu0 0.0
        %405 = vmatpush2.xpose.msra.mxu0 0.0
        %406 = vmatprep.subr.mxu0 0.0
        %407 = vmatpush2.xpose.msra.mxu0 0.0
        %408 = vmatprep.mubr.f32.mxu0 0.0
        %409 = vmatmul.mubr.f32.gmra.mxu0 %v291
        %v410 = vpop.f32.mrf.mxu0
        %v411 = vadd.f32 0.0, %v410
        %v412 = vpop.f32.mrf.mxu0
        %413 = vmatprep.mubr.f32.mxu0 0.0
        %414 = vmatmul.mubr.f32.gmra.mxu0 %v294
        %v415 = vpop.f32.mrf.mxu0
        %v416 = vadd.f32 0.0, %v415
        %v417 = vpop.f32.mrf.mxu0
        %418 = vdwg.mxu0
        %419 = vst [vmem:[%s151] sm:$0xff] %v411
        %420 = vst [vmem:[%s151 + $0x8] sm:$0xff] %v416
        %s421 = sand.u32 %s85, 1
        %s422 = scalar_lea.sflag [#allocation3], %s421
        %s423 = sand.u32 %s85, 1
        %s424 = smul.addr %s423, 16
        %s425 = scalar_lea.vmem [#allocation2], %s424
        // Predicated region
        $region29: #{tpu_custom_call.1} parent=27 // pred_check
          %p426 = pneg %p95
        $region30: #{tpu_custom_call.1} parent=27 // pred_check_branch
          %428 = sbr.rel (%p426) target = $region32
        $region31: #{tpu_custom_call.1} parent=27 // pred_region
          %s429 = smul.u32 2, %s21
          %s431 = ssub.s32 256, 256
          %432 = vsyncadd %s422, %s431
          %s433 = smul.addr %s429, 2
          %s434 = sadd.s32 %s20, %s433
          %s435 = smul.addr %s434, 128
          %s436 = scalar_lea.hbm %s2, %s435
          %s437 = sshll.u32 %s425, 4
          %s438 = int_to_ptr.vmem [resolvable:$true] %s437
          %443 = dma.vmem_to_hbm [thread:$0]  %s438, 256, %s436, %s422, 128, 256, 8
        $region32: #{tpu_custom_call.1} parent=27 // pred_fallthru
          _
      $region28: #{tpu_custom_call.1} parent=5 // pred_fallthru
        _
      %p444 = scmp.le.s32.totalorder 2, %s11
      // Predicated region
      $region33: #{tpu_custom_call.1} parent=5 // pred_check
        %p445 = pneg %p444
      $region34: #{tpu_custom_call.1} parent=5 // pred_check_branch
        %447 = sbr.rel (%p445) target = $region36
      $region35: #{tpu_custom_call.1} parent=5 // pred_region
        %s448 = ssub.s32 %s11, 2
        // Predicated region
        $region37: #{tpu_custom_call.1} parent=35 // pred_check
          %p449 = pneg %p101
        $region38: #{tpu_custom_call.1} parent=35 // pred_check_branch
          %451 = sbr.rel (%p449) target = $region40
        $region39: #{tpu_custom_call.1} parent=35 // pred_region
          %s452 = sand.u32 %s86, 1
          %s453 = scalar_lea.sflag [#allocation3], %s452
          %s454 = sand.u32 %s86, 1
          %s455 = smul.addr %s454, 16
          %s456 = scalar_lea.vmem [#allocation2], %s455
          %457 = dma.done %s453, 256
        $region40: #{tpu_custom_call.1} parent=35 // pred_fallthru
          _
      $region36: #{tpu_custom_call.1} parent=5 // pred_fallthru
        _
    $region6: #{tpu_custom_call.1} parent=1 // loop_footer
      %s15 = sadd.s32 1, %s11
    $region7: #{tpu_custom_call.1} parent=1 // loop_footer_branch
      %10 = sbr.rel target = $region3
    $region8: #{tpu_custom_call.1} parent=1 // loop_exit
      _
    %458 = vsyncpa [#allocation3], 1
    %s459 = scalar_lea.sflag [#allocation3], 1
    %460 = vsyncpa %s459, 1

</llo_original>
